<compile_context>
chip_gen: v6e
topology: v6e:2x2x1
jax: 0.10.0
libtpu: 0.0.40
codegen_flags: <defaults>
</compile_context>

<pallas_src>
import functools

import jax
import jax.numpy as jnp
from jax import lax
from jax.experimental import pallas as pl
from jax.experimental.pallas import tpu as pltpu


# ---------------------------------------------------------------------------
# Helpers
# ---------------------------------------------------------------------------
def _round_up(x, m):
    return ((x + m - 1) // m) * m


def _tiling(shape, tk_max):
    """Static tiling parameters for a (B, C, H, W) feature map."""
    b, c, h, w = shape
    bc, hw = b * c, h * w
    bc_pad = _round_up(max(bc, 8), 128)       # lane-dense Gram / MXU-friendly
    hw_pad0 = _round_up(hw, 128)
    tk = min(int(tk_max), hw_pad0)            # contraction tile (multiple of 128)
    hw_pad = _round_up(hw_pad0, tk)
    n_k = hw_pad // tk
    inv_norm = 1.0 / float(b * c * h * w)     # matches PyTorch gram_matrix div_
    inv_count = 1.0 / float(bc * bc)          # MSE 'mean' over the *unpadded* Gram
    return bc, hw, bc_pad, hw_pad, tk, n_k, inv_norm, inv_count


def _pad_feats(x, bc, hw, bc_pad, hw_pad, compute_dtype):
    feats = x.reshape(bc, hw).astype(compute_dtype)
    if bc_pad != bc or hw_pad != hw:
        feats = jnp.pad(feats, ((0, bc_pad - bc), (0, hw_pad - hw)))
    return feats


_COMPILER_PARAMS = pltpu.CompilerParams(
    dimension_semantics=("arbitrary",),        # K axis is a reduction
    vmem_limit_bytes=32 * 1024 * 1024,         # safe on v5e/v6e/v7x; headroom over v5e default
)


# ---------------------------------------------------------------------------
# Kernels
# ---------------------------------------------------------------------------
def _gram_kernel(feat_ref, g_ref, *, inv_norm):
    """Output-resident accumulation of F @ F^T over the K (HW) grid axis."""
    k = pl.program_id(0)

    @pl.when(k == 0)
    def _init():
        g_ref[...] = jnp.zeros_like(g_ref)

    f = feat_ref[...]
    # Contract last dim of both operands -> MXU, no transpose materialization.
    g_ref[...] += lax.dot_general(
        f, f,
        dimension_numbers=(((1,), (1,)), ((), ())),
        preferred_element_type=jnp.float32,
    )

    @pl.when(k == pl.num_programs(0) - 1)
    def _finalize():
        g_ref[...] *= inv_norm


def _style_loss_kernel(feat_ref, target_ref, loss_ref, acc_ref, *, inv_norm, inv_count):
    """Fused gram(x) + MSE against the (padded) target Gram. Only the scalar loss
    is written back to HBM; G lives only in the VMEM accumulator."""
    k = pl.program_id(0)

    @pl.when(k == 0)
    def _init():
        acc_ref[...] = jnp.zeros_like(acc_ref)

    f = feat_ref[...]
    acc_ref[...] += lax.dot_general(
        f, f,
        dimension_numbers=(((1,), (1,)), ((), ())),
        preferred_element_type=jnp.float32,
    )

    @pl.when(k == pl.num_programs(0) - 1)
    def _finalize():
        # Zero-padded rows/cols contribute zero to diff, so the sum over the
        # padded tile equals the sum over the true (BC, BC) region.
        diff = acc_ref[...] * inv_norm - target_ref[...]
        loss_ref[...] = (jnp.sum(diff * diff) * inv_count).reshape(1, 1)


# ---------------------------------------------------------------------------
# Cached pallas_call builders (one compiled artifact per feature-map shape)
# ---------------------------------------------------------------------------
@functools.lru_cache(maxsize=None)
def _build_gram_fn(shape, compute_dtype_name, tk_max):
    bc, hw, bc_pad, hw_pad, tk, n_k, inv_norm, _ = _tiling(shape, tk_max)
    compute_dtype = jnp.dtype(compute_dtype_name)

    call = pl.pallas_call(
        functools.partial(_gram_kernel, inv_norm=inv_norm),
        out_shape=jax.ShapeDtypeStruct((bc_pad, bc_pad), jnp.float32),
        grid_spec=pltpu.PrefetchScalarGridSpec(
            num_scalar_prefetch=0,
            grid=(n_k,),
            in_specs=[pl.BlockSpec((bc_pad, tk), lambda k: (0, k))],
            out_specs=pl.BlockSpec((bc_pad, bc_pad), lambda k: (0, 0)),
        ),
        compiler_params=_COMPILER_PARAMS,
    )

    def fn(x):
        feats = _pad_feats(x, bc, hw, bc_pad, hw_pad, compute_dtype)
        return call(feats)  # padded (bc_pad, bc_pad) Gram, f32

    return jax.jit(fn)


@functools.lru_cache(maxsize=None)
def _build_style_loss_fn(shape, compute_dtype_name, tk_max):
    bc, hw, bc_pad, hw_pad, tk, n_k, inv_norm, inv_count = _tiling(shape, tk_max)
    compute_dtype = jnp.dtype(compute_dtype_name)

    call = pl.pallas_call(
        functools.partial(_style_loss_kernel, inv_norm=inv_norm, inv_count=inv_count),
        out_shape=jax.ShapeDtypeStruct((1, 1), jnp.float32),
        grid_spec=pltpu.PrefetchScalarGridSpec(
            num_scalar_prefetch=0,
            grid=(n_k,),
            in_specs=[
                pl.BlockSpec((bc_pad, tk), lambda k: (0, k)),        # feats, streamed over K
                pl.BlockSpec((bc_pad, bc_pad), lambda k: (0, 0)),    # target Gram, resident
            ],
            out_specs=pl.BlockSpec((1, 1), lambda k: (0, 0)),
            scratch_shapes=[pltpu.VMEM((bc_pad, bc_pad), jnp.float32)],
        ),
        compiler_params=_COMPILER_PARAMS,
    )

    def fn(x, target_padded):
        feats = _pad_feats(x, bc, hw, bc_pad, hw_pad, compute_dtype)
        return call(feats, target_padded)[0, 0]

    return jax.jit(fn)


# ---------------------------------------------------------------------------
# Public API
# ---------------------------------------------------------------------------
def gram_matrix_pallas(x, compute_dtype=None, tk_max=2048):
    """x: (B, C, H, W) -> Gram matrix (B*C, B*C), float32. Matches torch gram_matrix."""
    b, c, h, w = x.shape
    bc = b * c
    dt = jnp.dtype(compute_dtype) if compute_dtype is not None else jnp.dtype(x.dtype)
    g_pad = _build_gram_fn(tuple(int(d) for d in x.shape), dt.name, int(tk_max))(x)
    return g_pad[:bc, :bc]


class StyleLossPallas:
    """Mirrors torch StyleLoss: holds the target Gram, forward stores self.loss and returns x."""

    def __init__(self, target, compute_dtype=None, tk_max=2048):
        self._compute_dtype = (
            jnp.dtype(compute_dtype) if compute_dtype is not None else jnp.dtype(target.dtype)
        )
        self._tk_max = int(tk_max)
        b, c, h, w = target.shape
        self._bc = b * c
        g_pad = _build_gram_fn(
            tuple(int(d) for d in target.shape), self._compute_dtype.name, self._tk_max
        )(target)
        self._target_padded = lax.stop_gradient(g_pad)        # .detach()
        self.target = self._target_padded[: self._bc, : self._bc]
        self.loss = None

    def forward(self, x):
        b, c, h, w = x.shape
        assert b * c == self._bc, "input Gram shape must match target Gram shape"
        fn = _build_style_loss_fn(
            tuple(int(d) for d in x.shape), self._compute_dtype.name, self._tk_max
        )
        self.loss = fn(x, self._target_padded)
        return x  # pass-through, like the torch module

    __call__ = forward


# ---------------------------------------------------------------------------
# Reference (plain JAX) + self-test
# ---------------------------------------------------------------------------
def _gram_ref(x):
    b, c, h, w = x.shape
    f = x.reshape(b * c, h * w)
    return (f @ f.T) / (b * c * h * w)


if __name__ == "__main__":
    key = jax.random.PRNGKey(0)
    k1, k2 = jax.random.split(key)

    B, C, H, W = 2, 4, 16, 16
    target = jax.random.normal(k1, (B, C, H, W), dtype=jnp.float32)
    x = jax.random.normal(k2, (B, C, H, W), dtype=jnp.float32)

    g_ref = _gram_ref(x)
    t_ref = _gram_ref(target)
    loss_ref = jnp.mean((g_ref - t_ref) ** 2)

    # f32 path (exact semantics check)
    style_loss = StyleLossPallas(target)
    out = style_loss(x)
    out = jax.block_until_ready(out)
    loss = jax.block_until_ready(style_loss.loss)
    g_tgt = jax.block_until_ready(style_loss.target)
    g_x = jax.block_until_ready(gram_matrix_pallas(x))

    assert out.shape == x.shape
    assert jnp.allclose(out, x)
    assert jnp.allclose(g_tgt, t_ref, rtol=1e-5, atol=1e-5)
    assert jnp.allclose(g_x, g_ref, rtol=1e-5, atol=1e-5)
    assert jnp.allclose(loss, loss_ref, rtol=1e-5, atol=1e-6)

    # bf16-feats path (production config for bandwidth-bound layers): loose tolerance
    style_loss_bf16 = StyleLossPallas(target, compute_dtype=jnp.bfloat16)
    style_loss_bf16(x)
    loss_bf16 = jax.block_until_ready(style_loss_bf16.loss)
    assert jnp.abs(loss_bf16 - loss_ref) <= 0.1 * jnp.abs(loss_ref) + 1e-4

    print("KERNEL_OK")
</pallas_src>

<mosaic_0001>
module attributes {stable_mosaic.version = 11 : i64} {
  func.func @_gram_kernel(%arg0: i32, %arg1: memref<128x256xf32, #tpu.memory_space<vmem>>, %arg2: memref<128x128xf32, #tpu.memory_space<vmem>>) attributes {dimension_semantics = [#tpu.dimension_semantics<arbitrary>], iteration_bounds = array<i64: 1>, scalar_prefetch = 0 : i64, scratch_operands = 0 : i64, tpu.core_type = #tpu.core_type<tc>, window_params = [{transform_indices = @transform_0, window_bounds = array<i64: 128, 256>}, {pipeline_mode = #tpu.pipeline_mode<synchronous>, transform_indices = @transform_1, window_bounds = array<i64: 128, 128>}]} {
    %c0_i32 = arith.constant 0 : i32
    %0 = arith.cmpi eq, %arg0, %c0_i32 : i32
    %1 = arith.extui %0 : i1 to i32
    %c0_i32_0 = arith.constant 0 : i32
    %2 = arith.cmpi ne, %1, %c0_i32_0 : i32
    scf.if %2 {
      %cst_8 = arith.constant 0.000000e+00 : f32
      %11 = vector.broadcast %cst_8 : f32 to vector<128x128xf32>
      %c0_9 = arith.constant 0 : index
      %c0_10 = arith.constant 0 : index
      %12 = vector.load %arg2[%c0_9, %c0_10] : memref<128x128xf32, #tpu.memory_space<vmem>>, vector<128x128xf32>
      tpu.vector_store %arg2[%c0_9, %c0_10], %11 {strides = array<i32>} : memref<128x128xf32, #tpu.memory_space<vmem>>, vector<128x128xf32>,
    } else {
    }
    %c0 = arith.constant 0 : index
    %c0_1 = arith.constant 0 : index
    %3 = vector.load %arg1[%c0, %c0_1] : memref<128x256xf32, #tpu.memory_space<vmem>>, vector<128x256xf32>
    %c0_2 = arith.constant 0 : index
    %c0_3 = arith.constant 0 : index
    %4 = vector.load %arg2[%c0_2, %c0_3] : memref<128x128xf32, #tpu.memory_space<vmem>>, vector<128x128xf32>
    %cst = arith.constant dense<0.000000e+00> : vector<128x128xf32>
    %5 = tpu.matmul %3, %3, %cst {dimension_numbers = #tpu.dot_dimension_numbers<[1], [1], [0], [0], [0, 0, 1, 0], [], []>} : vector<128x256xf32>, vector<128x256xf32>, vector<128x128xf32> -> vector<128x128xf32>
    %6 = arith.addf %4, %5 : vector<128x128xf32>
    %c0_4 = arith.constant 0 : index
    %c0_5 = arith.constant 0 : index
    %7 = vector.load %arg2[%c0_4, %c0_5] : memref<128x128xf32, #tpu.memory_space<vmem>>, vector<128x128xf32>
    tpu.vector_store %arg2[%c0_4, %c0_5], %6 {strides = array<i32>} : memref<128x128xf32, #tpu.memory_space<vmem>>, vector<128x128xf32>,
    %c0_i32_6 = arith.constant 0 : i32
    %8 = arith.cmpi eq, %arg0, %c0_i32_6 : i32
    %9 = arith.extui %8 : i1 to i32
    %c0_i32_7 = arith.constant 0 : i32
    %10 = arith.cmpi ne, %9, %c0_i32_7 : i32
    scf.if %10 {
      %c0_8 = arith.constant 0 : index
      %c0_9 = arith.constant 0 : index
      %11 = vector.load %arg2[%c0_8, %c0_9] : memref<128x128xf32, #tpu.memory_space<vmem>>, vector<128x128xf32>
      %cst_10 = arith.constant 4.8828125E-4 : f32
      %12 = vector.broadcast %cst_10 : f32 to vector<128x128xf32>
      %13 = arith.mulf %11, %12 : vector<128x128xf32>
      %c0_11 = arith.constant 0 : index
      %c0_12 = arith.constant 0 : index
      %14 = vector.load %arg2[%c0_11, %c0_12] : memref<128x128xf32, #tpu.memory_space<vmem>>, vector<128x128xf32>
      tpu.vector_store %arg2[%c0_11, %c0_12], %13 {strides = array<i32>} : memref<128x128xf32, #tpu.memory_space<vmem>>, vector<128x128xf32>,
    } else {
    }
    return
  }
  func.func @transform_0(%arg0: i32) -> (i32, i32) {
    %c0_i32 = arith.constant 0 : i32
    %c0_i32_0 = arith.constant 0 : i32
    return %c0_i32, %arg0 : i32, i32
  }
  func.func @transform_1(%arg0: i32) -> (i32, i32) {
    %c0_i32 = arith.constant 0 : i32
    %c0_i32_0 = arith.constant 0 : i32
    %c0_i32_1 = arith.constant 0 : i32
    return %c0_i32, %c0_i32_0 : i32, i32
  }
}

</mosaic_0001>

<llo_original>
// kernel: fn.1
$region0: #{fn.1}
  #allocation0 [shape = 'u32[]', space=smem, size = 0x4, offset = 0x4, fixed_abs, tag = 'smem constant byte address 0x4 - core index']
  #allocation1 [shape = 'u32[144,128]{1,0:T(1,128)}', space=vmem, size = 0x12000, scoped, tag = 'internal scratch']
  %s0 = inlined_call_operand.vmem [shape: f32[128,256], index: 0, kind: input, shape index: {}]
  %s1 = inlined_call_operand.hbm [shape: f32[128,128], index: 1, kind: output, shape index: {}]
  %s2 = sld [smem:[#allocation0]]
  $region22: #{fn.1} parent=0
    _
  %s4 = ssub.s32 1, %s2
  %s5 = scalar_select 0, %s4, %s2
  $region1: #{fn.1} parent=0
    #allocation2 [shape = 'u8[65536]{0}', space=vmem, size = 0x10000, scoped, tag = 'output window, operand 0, single buffered']
    #allocation3 [shape = 's32[1]{0}', space=sflag, size = 0x4, scoped, tag = 'scoped memory for fn.1']
    %6 = vsyncpa [#allocation3], 0
    // Predicated region
    $region2: #{fn.1} parent=1 // pred_check
      _
    $region3: #{fn.1} parent=1 // pred_check_branch
      %8 = sbr.rel (0) target = $region5
    $region4: #{fn.1} parent=1 // pred_region
      _
    $region5: #{fn.1} parent=1 // pred_fallthru
      _
    %p9 = scmp.eq.s32.totalorder 0, 0
    // Predicated region
    $region6: #{fn.1} parent=1 // pred_check
      %p10 = pneg %p9
    $region7: #{fn.1} parent=1 // pred_check_branch
      %12 = sbr.rel (%p10) target = $region9
    $region8: #{fn.1} parent=1 // pred_region
      %13 = vst [vmem:[#allocation2] sm:$0xff] 0.0
      %14 = vst [vmem:[#allocation2 + $0x8] sm:$0xff] 0.0
      %15 = vst [vmem:[#allocation2 + $0x10] sm:$0xff] 0.0
      %16 = vst [vmem:[#allocation2 + $0x18] sm:$0xff] 0.0
      %17 = vst [vmem:[#allocation2 + $0x20] sm:$0xff] 0.0
      %18 = vst [vmem:[#allocation2 + $0x28] sm:$0xff] 0.0
      %19 = vst [vmem:[#allocation2 + $0x30] sm:$0xff] 0.0
      %20 = vst [vmem:[#allocation2 + $0x38] sm:$0xff] 0.0
      %21 = vst [vmem:[#allocation2 + $0x40] sm:$0xff] 0.0
      %22 = vst [vmem:[#allocation2 + $0x48] sm:$0xff] 0.0
      %23 = vst [vmem:[#allocation2 + $0x50] sm:$0xff] 0.0
      %24 = vst [vmem:[#allocation2 + $0x58] sm:$0xff] 0.0
      %25 = vst [vmem:[#allocation2 + $0x60] sm:$0xff] 0.0
      %26 = vst [vmem:[#allocation2 + $0x68] sm:$0xff] 0.0
      %27 = vst [vmem:[#allocation2 + $0x70] sm:$0xff] 0.0
      %28 = vst [vmem:[#allocation2 + $0x78] sm:$0xff] 0.0
    $region9: #{fn.1} parent=1 // pred_fallthru
      _
    %v29 = vld [vmem:[%s0] sm:$0xff]
    %v30 = vld [vmem:[%s0 + $0x8] sm:$0xff]
    %v31 = vld [vmem:[%s0 + $0x10] sm:$0xff]
    %v32 = vld [vmem:[%s0 + $0x18] sm:$0xff]
    %v33 = vld [vmem:[%s0 + $0x20] sm:$0xff]
    %v34 = vld [vmem:[%s0 + $0x28] sm:$0xff]
    %v35 = vld [vmem:[%s0 + $0x30] sm:$0xff]
    %v36 = vld [vmem:[%s0 + $0x38] sm:$0xff]
    %v37 = vld [vmem:[%s0 + $0x40] sm:$0xff]
    %v38 = vld [vmem:[%s0 + $0x48] sm:$0xff]
    %v39 = vld [vmem:[%s0 + $0x50] sm:$0xff]
    %v40 = vld [vmem:[%s0 + $0x58] sm:$0xff]
    %v41 = vld [vmem:[%s0 + $0x60] sm:$0xff]
    %v42 = vld [vmem:[%s0 + $0x68] sm:$0xff]
    %v43 = vld [vmem:[%s0 + $0x70] sm:$0xff]
    %v44 = vld [vmem:[%s0 + $0x78] sm:$0xff]
    %v45 = vld [vmem:[%s0 + $0x80] sm:$0xff]
    %v46 = vld [vmem:[%s0 + $0x88] sm:$0xff]
    %v47 = vld [vmem:[%s0 + $0x90] sm:$0xff]
    %v48 = vld [vmem:[%s0 + $0x98] sm:$0xff]
    %v49 = vld [vmem:[%s0 + $0xa0] sm:$0xff]
    %v50 = vld [vmem:[%s0 + $0xa8] sm:$0xff]
    %v51 = vld [vmem:[%s0 + $0xb0] sm:$0xff]
    %v52 = vld [vmem:[%s0 + $0xb8] sm:$0xff]
    %v53 = vld [vmem:[%s0 + $0xc0] sm:$0xff]
    %v54 = vld [vmem:[%s0 + $0xc8] sm:$0xff]
    %v55 = vld [vmem:[%s0 + $0xd0] sm:$0xff]
    %v56 = vld [vmem:[%s0 + $0xd8] sm:$0xff]
    %v57 = vld [vmem:[%s0 + $0xe0] sm:$0xff]
    %v58 = vld [vmem:[%s0 + $0xe8] sm:$0xff]
    %v59 = vld [vmem:[%s0 + $0xf0] sm:$0xff]
    %v60 = vld [vmem:[%s0 + $0xf8] sm:$0xff]
    %v61 = vld [vmem:[#allocation2] sm:$0xff]
    %v62 = vld [vmem:[#allocation2 + $0x8] sm:$0xff]
    %v63 = vld [vmem:[#allocation2 + $0x10] sm:$0xff]
    %v64 = vld [vmem:[#allocation2 + $0x18] sm:$0xff]
    %v65 = vld [vmem:[#allocation2 + $0x20] sm:$0xff]
    %v66 = vld [vmem:[#allocation2 + $0x28] sm:$0xff]
    %v67 = vld [vmem:[#allocation2 + $0x30] sm:$0xff]
    %v68 = vld [vmem:[#allocation2 + $0x38] sm:$0xff]
    %v69 = vld [vmem:[#allocation2 + $0x40] sm:$0xff]
    %v70 = vld [vmem:[#allocation2 + $0x48] sm:$0xff]
    %v71 = vld [vmem:[#allocation2 + $0x50] sm:$0xff]
    %v72 = vld [vmem:[#allocation2 + $0x58] sm:$0xff]
    %v73 = vld [vmem:[#allocation2 + $0x60] sm:$0xff]
    %v74 = vld [vmem:[#allocation2 + $0x68] sm:$0xff]
    %v75 = vld [vmem:[#allocation2 + $0x70] sm:$0xff]
    %v76 = vld [vmem:[#allocation2 + $0x78] sm:$0xff]
    %77 = vmatprep.subr.mxu0 %v60
    %78 = vmatpush1.xpose.msra.mxu0 %v59
    %79 = vmatprep.subr.mxu0 %v58
    %80 = vmatpush1.xpose.msra.mxu0 %v57
    %81 = vmatprep.subr.mxu0 %v56
    %82 = vmatpush1.xpose.msra.mxu0 %v55
    %83 = vmatprep.subr.mxu0 %v54
    %84 = vmatpush1.xpose.msra.mxu0 %v53
    %85 = vmatprep.subr.mxu0 %v52
    %86 = vmatpush1.xpose.msra.mxu0 %v51
    %87 = vmatprep.subr.mxu0 %v50
    %88 = vmatpush1.xpose.msra.mxu0 %v49
    %89 = vmatprep.subr.mxu0 %v48
    %90 = vmatpush1.xpose.msra.mxu0 %v47
    %91 = vmatprep.subr.mxu0 %v46
    %92 = vmatpush1.xpose.msra.mxu0 %v45
    %93 = vmatprep.subr.mxu0 %v44
    %94 = vmatpush1.xpose.msra.mxu0 %v43
    %95 = vmatprep.subr.mxu0 %v42
    %96 = vmatpush1.xpose.msra.mxu0 %v41
    %97 = vmatprep.subr.mxu0 %v40
    %98 = vmatpush1.xpose.msra.mxu0 %v39
    %99 = vmatprep.subr.mxu0 %v38
    %100 = vmatpush1.xpose.msra.mxu0 %v37
    %101 = vmatprep.subr.mxu0 %v36
    %102 = vmatpush1.xpose.msra.mxu0 %v35
    %103 = vmatprep.subr.mxu0 %v34
    %104 = vmatpush1.xpose.msra.mxu0 %v33
    %105 = vmatprep.subr.mxu0 %v32
    %106 = vmatpush1.xpose.msra.mxu0 %v31
    %107 = vmatprep.subr.mxu0 %v30
    %108 = vmatpush1.xpose.msra.mxu0 %v29
    %109 = vmatprep.subr.mxu0 0.0
    %110 = vmatpush2.xpose.msra.mxu0 0.0
    %111 = vmatprep.subr.mxu0 0.0
    %112 = vmatpush2.xpose.msra.mxu0 0.0
    %113 = vmatprep.subr.mxu0 0.0
    %114 = vmatpush2.xpose.msra.mxu0 0.0
    %115 = vmatprep.subr.mxu0 0.0
    %116 = vmatpush2.xpose.msra.mxu0 0.0
    %117 = vmatprep.subr.mxu0 0.0
    %118 = vmatpush2.xpose.msra.mxu0 0.0
    %119 = vmatprep.subr.mxu0 0.0
    %120 = vmatpush2.xpose.msra.mxu0 0.0
    %121 = vmatprep.subr.mxu0 0.0
    %122 = vmatpush2.xpose.msra.mxu0 0.0
    %123 = vmatprep.subr.mxu0 0.0
    %124 = vmatpush2.xpose.msra.mxu0 0.0
    %125 = vmatprep.subr.mxu0 0.0
    %126 = vmatpush2.xpose.msra.mxu0 0.0
    %127 = vmatprep.subr.mxu0 0.0
    %128 = vmatpush2.xpose.msra.mxu0 0.0
    %129 = vmatprep.subr.mxu0 0.0
    %130 = vmatpush2.xpose.msra.mxu0 0.0
    %131 = vmatprep.subr.mxu0 0.0
    %132 = vmatpush2.xpose.msra.mxu0 0.0
    %133 = vmatprep.subr.mxu0 0.0
    %134 = vmatpush2.xpose.msra.mxu0 0.0
    %135 = vmatprep.subr.mxu0 0.0
    %136 = vmatpush2.xpose.msra.mxu0 0.0
    %137 = vmatprep.subr.mxu0 0.0
    %138 = vmatpush2.xpose.msra.mxu0 0.0
    %139 = vmatprep.subr.mxu0 0.0
    %140 = vmatpush2.xpose.msra.mxu0 0.0
    %141 = vmatprep.mubr.f32.mxu0 %v30
    %142 = vmatmul.mubr.f32.gmra.mxu0 %v29
    %v143 = vpop.f32.mrf.mxu0
    %v144 = vadd.f32 0.0, %v143
    %v145 = vpop.f32.mrf.mxu0
    %146 = vmatprep.mubr.f32.mxu0 %v32
    %147 = vmatmul.mubr.f32.gmra.mxu0 %v31
    %v148 = vpop.f32.mrf.mxu0
    %v149 = vadd.f32 0.0, %v148
    %v150 = vpop.f32.mrf.mxu0
    %151 = vmatprep.mubr.f32.mxu0 %v34
    %152 = vmatmul.mubr.f32.gmra.mxu0 %v33
    %v153 = vpop.f32.mrf.mxu0
    %v154 = vadd.f32 0.0, %v153
    %v155 = vpop.f32.mrf.mxu0
    %156 = vmatprep.mubr.f32.mxu0 %v36
    %157 = vmatmul.mubr.f32.gmra.mxu0 %v35
    %v158 = vpop.f32.mrf.mxu0
    %v159 = vadd.f32 0.0, %v158
    %v160 = vpop.f32.mrf.mxu0
    %161 = vmatprep.mubr.f32.mxu0 %v38
    %162 = vmatmul.mubr.f32.gmra.mxu0 %v37
    %v163 = vpop.f32.mrf.mxu0
    %v164 = vadd.f32 0.0, %v163
    %v165 = vpop.f32.mrf.mxu0
    %166 = vmatprep.mubr.f32.mxu0 %v40
    %167 = vmatmul.mubr.f32.gmra.mxu0 %v39
    %v168 = vpop.f32.mrf.mxu0
    %v169 = vadd.f32 0.0, %v168
    %v170 = vpop.f32.mrf.mxu0
    %171 = vmatprep.mubr.f32.mxu0 %v42
    %172 = vmatmul.mubr.f32.gmra.mxu0 %v41
    %v173 = vpop.f32.mrf.mxu0
    %v174 = vadd.f32 0.0, %v173
    %v175 = vpop.f32.mrf.mxu0
    %176 = vmatprep.mubr.f32.mxu0 %v44
    %177 = vmatmul.mubr.f32.gmra.mxu0 %v43
    %v178 = vpop.f32.mrf.mxu0
    %v179 = vadd.f32 0.0, %v178
    %v180 = vpop.f32.mrf.mxu0
    %181 = vmatprep.mubr.f32.mxu0 %v46
    %182 = vmatmul.mubr.f32.gmra.mxu0 %v45
    %v183 = vpop.f32.mrf.mxu0
    %v184 = vadd.f32 0.0, %v183
    %v185 = vpop.f32.mrf.mxu0
    %186 = vmatprep.mubr.f32.mxu0 %v48
    %187 = vmatmul.mubr.f32.gmra.mxu0 %v47
    %v188 = vpop.f32.mrf.mxu0
    %v189 = vadd.f32 0.0, %v188
    %v190 = vpop.f32.mrf.mxu0
    %191 = vmatprep.mubr.f32.mxu0 %v50
    %192 = vmatmul.mubr.f32.gmra.mxu0 %v49
    %v193 = vpop.f32.mrf.mxu0
    %v194 = vadd.f32 0.0, %v193
    %v195 = vpop.f32.mrf.mxu0
    %196 = vmatprep.mubr.f32.mxu0 %v52
    %197 = vmatmul.mubr.f32.gmra.mxu0 %v51
    %v198 = vpop.f32.mrf.mxu0
    %v199 = vadd.f32 0.0, %v198
    %v200 = vpop.f32.mrf.mxu0
    %201 = vmatprep.mubr.f32.mxu0 %v54
    %202 = vmatmul.mubr.f32.gmra.mxu0 %v53
    %v203 = vpop.f32.mrf.mxu0
    %v204 = vadd.f32 0.0, %v203
    %v205 = vpop.f32.mrf.mxu0
    %206 = vmatprep.mubr.f32.mxu0 %v56
    %207 = vmatmul.mubr.f32.gmra.mxu0 %v55
    %v208 = vpop.f32.mrf.mxu0
    %v209 = vadd.f32 0.0, %v208
    %v210 = vpop.f32.mrf.mxu0
    %211 = vmatprep.mubr.f32.mxu0 %v58
    %212 = vmatmul.mubr.f32.gmra.mxu0 %v57
    %v213 = vpop.f32.mrf.mxu0
    %v214 = vadd.f32 0.0, %v213
    %v215 = vpop.f32.mrf.mxu0
    %216 = vmatprep.mubr.f32.mxu0 %v60
    %217 = vmatmul.mubr.f32.gmra.mxu0 %v59
    %v218 = vpop.f32.mrf.mxu0
    %v219 = vadd.f32 0.0, %v218
    %v220 = vpop.f32.mrf.mxu0
    %221 = vdwg.mxu0
    %v222 = vadd.f32 %v61, %v144
    %v223 = vadd.f32 %v62, %v149
    %v224 = vadd.f32 %v63, %v154
    %v225 = vadd.f32 %v64, %v159
    %v226 = vadd.f32 %v65, %v164
    %v227 = vadd.f32 %v66, %v169
    %v228 = vadd.f32 %v67, %v174
    %v229 = vadd.f32 %v68, %v179
    %v230 = vadd.f32 %v69, %v184
    %v231 = vadd.f32 %v70, %v189
    %v232 = vadd.f32 %v71, %v194
    %v233 = vadd.f32 %v72, %v199
    %v234 = vadd.f32 %v73, %v204
    %v235 = vadd.f32 %v74, %v209
    %v236 = vadd.f32 %v75, %v214
    %v237 = vadd.f32 %v76, %v219
    %238 = vst [vmem:[#allocation2] sm:$0xff] %v222
    %239 = vst [vmem:[#allocation2 + $0x8] sm:$0xff] %v223
    %240 = vst [vmem:[#allocation2 + $0x10] sm:$0xff] %v224
    %241 = vst [vmem:[#allocation2 + $0x18] sm:$0xff] %v225
    %242 = vst [vmem:[#allocation2 + $0x20] sm:$0xff] %v226
    %243 = vst [vmem:[#allocation2 + $0x28] sm:$0xff] %v227
    %244 = vst [vmem:[#allocation2 + $0x30] sm:$0xff] %v228
    %245 = vst [vmem:[#allocation2 + $0x38] sm:$0xff] %v229
    %246 = vst [vmem:[#allocation2 + $0x40] sm:$0xff] %v230
    %247 = vst [vmem:[#allocation2 + $0x48] sm:$0xff] %v231
    %248 = vst [vmem:[#allocation2 + $0x50] sm:$0xff] %v232
    %249 = vst [vmem:[#allocation2 + $0x58] sm:$0xff] %v233
    %250 = vst [vmem:[#allocation2 + $0x60] sm:$0xff] %v234
    %251 = vst [vmem:[#allocation2 + $0x68] sm:$0xff] %v235
    %252 = vst [vmem:[#allocation2 + $0x70] sm:$0xff] %v236
    %253 = vst [vmem:[#allocation2 + $0x78] sm:$0xff] %v237
    // Predicated region
    $region10: #{fn.1} parent=1 // pred_check
      %p254 = pneg %p9
    $region11: #{fn.1} parent=1 // pred_check_branch
      %256 = sbr.rel (%p254) target = $region13
    $region12: #{fn.1} parent=1 // pred_region
      %v257 = vld [vmem:[#allocation2] sm:$0xff]
      %v258 = vld [vmem:[#allocation2 + $0x8] sm:$0xff]
      %v259 = vld [vmem:[#allocation2 + $0x10] sm:$0xff]
      %v260 = vld [vmem:[#allocation2 + $0x18] sm:$0xff]
      %v261 = vld [vmem:[#allocation2 + $0x20] sm:$0xff]
      %v262 = vld [vmem:[#allocation2 + $0x28] sm:$0xff]
      %v263 = vld [vmem:[#allocation2 + $0x30] sm:$0xff]
      %v264 = vld [vmem:[#allocation2 + $0x38] sm:$0xff]
      %v265 = vld [vmem:[#allocation2 + $0x40] sm:$0xff]
      %v266 = vld [vmem:[#allocation2 + $0x48] sm:$0xff]
      %v267 = vld [vmem:[#allocation2 + $0x50] sm:$0xff]
      %v268 = vld [vmem:[#allocation2 + $0x58] sm:$0xff]
      %v269 = vld [vmem:[#allocation2 + $0x60] sm:$0xff]
      %v270 = vld [vmem:[#allocation2 + $0x68] sm:$0xff]
      %v271 = vld [vmem:[#allocation2 + $0x70] sm:$0xff]
      %v272 = vld [vmem:[#allocation2 + $0x78] sm:$0xff]
      %v273 = vmul.f32 %v257, 0.00048828125
      %v274 = vmul.f32 %v258, 0.00048828125
      %v275 = vmul.f32 %v259, 0.00048828125
      %v276 = vmul.f32 %v260, 0.00048828125
      %v277 = vmul.f32 %v261, 0.00048828125
      %v278 = vmul.f32 %v262, 0.00048828125
      %v279 = vmul.f32 %v263, 0.00048828125
      %v280 = vmul.f32 %v264, 0.00048828125
      %v281 = vmul.f32 %v265, 0.00048828125
      %v282 = vmul.f32 %v266, 0.00048828125
      %v283 = vmul.f32 %v267, 0.00048828125
      %v284 = vmul.f32 %v268, 0.00048828125
      %v285 = vmul.f32 %v269, 0.00048828125
      %v286 = vmul.f32 %v270, 0.00048828125
      %v287 = vmul.f32 %v271, 0.00048828125
      %v288 = vmul.f32 %v272, 0.00048828125
      %289 = vst [vmem:[#allocation2] sm:$0xff] %v273
      %290 = vst [vmem:[#allocation2 + $0x8] sm:$0xff] %v274
      %291 = vst [vmem:[#allocation2 + $0x10] sm:$0xff] %v275
      %292 = vst [vmem:[#allocation2 + $0x18] sm:$0xff] %v276
      %293 = vst [vmem:[#allocation2 + $0x20] sm:$0xff] %v277
      %294 = vst [vmem:[#allocation2 + $0x28] sm:$0xff] %v278
      %295 = vst [vmem:[#allocation2 + $0x30] sm:$0xff] %v279
      %296 = vst [vmem:[#allocation2 + $0x38] sm:$0xff] %v280
      %297 = vst [vmem:[#allocation2 + $0x40] sm:$0xff] %v281
      %298 = vst [vmem:[#allocation2 + $0x48] sm:$0xff] %v282
      %299 = vst [vmem:[#allocation2 + $0x50] sm:$0xff] %v283
      %300 = vst [vmem:[#allocation2 + $0x58] sm:$0xff] %v284
      %301 = vst [vmem:[#allocation2 + $0x60] sm:$0xff] %v285
      %302 = vst [vmem:[#allocation2 + $0x68] sm:$0xff] %v286
      %303 = vst [vmem:[#allocation2 + $0x70] sm:$0xff] %v287
      %304 = vst [vmem:[#allocation2 + $0x78] sm:$0xff] %v288
    $region13: #{fn.1} parent=1 // pred_fallthru
      _
    // Predicated region
    $region14: #{fn.1} parent=1 // pred_check
      _
    $region15: #{fn.1} parent=1 // pred_check_branch
      %306 = sbr.rel (0) target = $region17
    $region16: #{fn.1} parent=1 // pred_region
      %s308 = ssub.s32 2048, 2048
      %309 = vsyncadd [#allocation3], %s308
      %s310 = sshll.u32 [#allocation2], 4
      %s311 = int_to_ptr.vmem [resolvable:$true] %s310
      %316 = dma.vmem_to_hbm [thread:$0]  %s311, 2048, %s1, [#allocation3], 128, 128, 8
    $region17: #{fn.1} parent=1 // pred_fallthru
      _
    // Predicated region
    $region18: #{fn.1} parent=1 // pred_check
      _
    $region19: #{fn.1} parent=1 // pred_check_branch
      %318 = sbr.rel (0) target = $region21
    $region20: #{fn.1} parent=1 // pred_region
      %319 = dma.done [#allocation3], 2048
    $region21: #{fn.1} parent=1 // pred_fallthru
      _
    %320 = vsyncpa [#allocation3], 1

</llo_original>
